<compile_context>
chip_gen: v5e
topology: v5e:2x2
jax: 0.10.0
libtpu: 0.0.40
codegen_flags: <defaults>
</compile_context>

<pallas_src>
import functools
import math

import jax
import jax.numpy as jnp
from jax.experimental import pallas as pl
from jax.experimental.pallas import tpu as pltpu

TASK_NBG = {0: 1, 1: 2, 3: 3, 6: 4}   # task_id -> foreground channel
LANE = 128
SUBLANE = 8


def _tal5_kernel(ch_ref, pred_ref, tgt_ref, out_ref, *, n_valid, mask_needed):
    p = pl.program_id(0)        # spatial split index   (parallel)
    b = pl.program_id(1)        # batch sample          (parallel)
    s = pl.program_id(2)        # spatial row-block     (accumulation, innermost)

    _, C, TH, WL = pred_ref.shape

    @pl.when(s == 0)
    def _init():
        out_ref[...] = jnp.zeros(out_ref.shape, jnp.float32)

    c = ch_ref[b]                                   # foreground channel id (SMEM scalar)

    # d = fg - bg = sum_j (+1 if j==c else -1) * p_j   -> one mul + one add per channel
    d = None
    for j in range(C):                              # static unroll, C is small
        pj = pred_ref[0, j].astype(jnp.float32)     # upcast in-kernel (bf16-safe math)
        wj = jnp.where(c == j, 1.0, -1.0)           # scalar +/-1 weight
        d = pj * wj if d is None else d + pj * wj

    y_pos = tgt_ref[0] > 0                          # bool compare on the native dtype
    # numerically stable  softplus(d) - y*d  ==  2-class CE with logits [bg, fg]
    ce = (jnp.maximum(d, 0.0) - jnp.where(y_pos, d, 0.0)
          + jnp.log1p(jnp.exp(-jnp.abs(d))))

    def _accum(vals):
        # vreg-wise partial sums; the full reduce + 1/N scale happen in the wrapper
        k = TH // SUBLANE
        r = TH - k * SUBLANE
        if k:
            out_ref[0, 0] += vals[: k * SUBLANE].reshape(k, SUBLANE, WL).sum(axis=0)
        if r:                                       # only for tiny single-block inputs
            out_ref[0, 0, :r, :] += vals[k * SUBLANE:, :]

    if mask_needed:                                 # static: a garbage/padded tail exists
        is_last = jnp.logical_and(p == pl.num_programs(0) - 1,
                                  s == pl.num_programs(2) - 1)

        @pl.when(is_last)                           # only the final block sees the tail
        def _masked():
            g = p * pl.num_programs(2) + s          # global row-block index
            row = jax.lax.broadcasted_iota(jnp.int32, (TH, WL), 0)
            lane = jax.lax.broadcasted_iota(jnp.int32, (TH, WL), 1)
            lin = (g * TH + row) * WL + lane
            # select (not multiply-by-zero): drops NaN/Inf garbage from the over-read tail
            _accum(jnp.where(lin < n_valid, ce, 0.0))

        @pl.when(jnp.logical_not(is_last))
        def _interior():
            _accum(ce)
    else:
        _accum(ce)


def _sublane_multiple(dtype):
    # sublane tile multiple required for this dtype: f32/i32 -> 8, bf16 -> 16, int8 -> 32
    return max(SUBLANE, 32 // jnp.dtype(dtype).itemsize)


@functools.partial(jax.jit, static_argnames=("tile_rows",))
def _tal5_forward(channels, predict, target, *, tile_rows=2048):
    B, C = predict.shape[0], predict.shape[1]
    n = math.prod(predict.shape[2:])                # total spatial elements per sample

    rows = -(-n // LANE)                            # ceil(n / 128): lane-dense row count
    mult = max(_sublane_multiple(predict.dtype), _sublane_multiple(target.dtype))

    # tile rows: large by default, multiple of `mult`, bounded so the double-buffered
    # working set stays far below every generation's VMEM (v7x: 64 MiB)
    bytes_per_row = LANE * (C * jnp.dtype(predict.dtype).itemsize
                            + jnp.dtype(target.dtype).itemsize)
    vmem_rows = max(mult, (int((40 << 20) // (2 * bytes_per_row)) // mult) * mult)
    th_cap = min(max(mult, (tile_rows // mult) * mult), vmem_rows)

    if rows <= th_cap:
        th, ns = rows, 1                            # single block: full-dim, no tiling rule
    else:
        th = th_cap                                 # multiple of `mult`; last block ragged
        ns = -(-rows // th)

    assert ns * th * LANE < 2 ** 31, "per-sample index math would overflow int32"

    # 2-way spatial split so both v7x TensorCores get work when B alone can't provide it
    P = 2 if (B % 2 == 1 and ns >= 2 and ns % 2 == 0) else 1
    ns_p = ns // P

    # only lane-pad (<=127 elements); row raggedness is absorbed by the last grid block
    n_lane = rows * LANE
    pred_flat = predict.reshape(B, C, n)            # native dtype (bf16 stays bf16)
    tgt_flat = target.reshape(B, n)                 # native dtype (no int8 narrowing pass)
    if n_lane != n:
        pred_flat = jnp.pad(pred_flat, ((0, 0), (0, 0), (0, n_lane - n)))
        tgt_flat = jnp.pad(tgt_flat, ((0, 0), (0, n_lane - n)))
    pred4d = pred_flat.reshape(B, C, rows, LANE)    # lane-dense layout
    tgt3d = tgt_flat.reshape(B, rows, LANE)

    mask_needed = (n_lane != n) or (ns * th != rows)
    kernel = functools.partial(_tal5_kernel, n_valid=n, mask_needed=mask_needed)

    # tight VMEM request: 2 buffers per input block + a few MiB of headroom
    pred_block = C * th * LANE * jnp.dtype(predict.dtype).itemsize
    tgt_block = th * LANE * jnp.dtype(target.dtype).itemsize
    vmem_limit = int(min(2 * (pred_block + tgt_block) + (4 << 20), 64 << 20))

    out = pl.pallas_call(
        kernel,
        out_shape=jax.ShapeDtypeStruct((P, B, SUBLANE, LANE), jnp.float32),
        grid_spec=pltpu.PrefetchScalarGridSpec(
            num_scalar_prefetch=1,                  # per-sample fg channel ids in SMEM
            grid=(P, B, ns_p),
            in_specs=[
                pl.BlockSpec((1, C, th, LANE),
                             lambda p, b, s, ch: (b, 0, p * ns_p + s, 0)),
                pl.BlockSpec((1, th, LANE),
                             lambda p, b, s, ch: (b, p * ns_p + s, 0)),
            ],
            out_specs=pl.BlockSpec((1, 1, SUBLANE, LANE),
                                   lambda p, b, s, ch: (p, b, 0, 0)),
        ),
        compiler_params=pltpu.CompilerParams(
            dimension_semantics=("parallel", "parallel", "arbitrary"),
            vmem_limit_bytes=vmem_limit,
        ),
    )(channels, pred4d, tgt3d)

    per_sample = jnp.sum(out, axis=(0, 2, 3)) / jnp.float32(n)
    return jnp.sum(per_sample)                      # TAL5 sums per-sample losses over batch


def tal5_loss(predict, target, task_id, *, tile_rows=2048):
    """predict: (B, 5, *spatial) logits (f32/bf16); target: (B, *spatial) int labels;
    task_id: host-side sequence of ints in {0, 1, 3, 6}."""
    # TODO(synk): softmax=False branch (nll_loss on log-probabilities) not implemented.
    # NOTE: the PyTorch module's in-place binarization of `targets` is not reproduced.
    channels = jnp.asarray([TASK_NBG[int(t)] for t in task_id], dtype=jnp.int32)
    return _tal5_forward(channels, jnp.asarray(predict), jnp.asarray(target),
                         tile_rows=tile_rows)


def _reference(predict, target, task_id):
    """Pure-JAX mirror of TAL5.forward (softmax=True); accumulates channels in f32."""
    B, C = predict.shape[:2]
    total = jnp.float32(0.0)
    for i in range(B):
        c = TASK_NBG[int(task_id[i])]
        p = predict[i].astype(jnp.float32)
        bg = sum(p[j] for j in range(C) if j != c)
        fg = p[c]
        logits = jnp.stack([bg, fg], axis=0)                 # (2, *spatial)
        y = (target[i] > 0).astype(jnp.int32)
        logp = jax.nn.log_softmax(logits, axis=0)
        ce = -jnp.where(y == 1, logp[1], logp[0])
        total = total + jnp.mean(ce)
    return total


if __name__ == "__main__":
    ks = jax.random.split(jax.random.PRNGKey(0), 6)

    # 1) basic: B=2, f32 logits, spatial size a multiple of 1024 (no pad, no mask)
    B, C, D, H, W = 2, 5, 4, 16, 16
    pred1 = jax.random.normal(ks[0], (B, C, D, H, W), dtype=jnp.float32)
    tgt1 = jax.random.randint(ks[1], (B, D, H, W), 0, 5, dtype=jnp.int32)
    task1 = [0, 3]                                  # -> foreground channels [1, 3]
    out1 = jax.block_until_ready(tal5_loss(pred1, tgt1, task1))
    ref1 = _reference(pred1, tgt1, task1)
    assert jnp.allclose(out1, ref1, atol=1e-3, rtol=1e-3), (out1, ref1)

    # 2) ragged spatial size: lane pad + masked tail, single block with rows % 8 != 0
    B, C, D, H, W = 1, 5, 3, 10, 23
    pred2 = jax.random.normal(ks[2], (B, C, D, H, W), dtype=jnp.float32)
    tgt2 = jax.random.randint(ks[3], (B, D, H, W), 0, 5, dtype=jnp.int32)
    task2 = [1]
    out2 = jax.block_until_ready(tal5_loss(pred2, tgt2, task2))
    ref2 = _reference(pred2, tgt2, task2)
    assert jnp.allclose(out2, ref2, atol=1e-3, rtol=1e-3), (out2, ref2)

    # 3) bf16 logits, multi-block grid with ragged (over-read) last block, B=1 so the
    #    2-way spatial split kicks in (both v7x TensorCores busy)
    B, C, D, H, W = 1, 5, 7, 32, 32
    pred3 = jax.random.normal(ks[4], (B, C, D, H, W), dtype=jnp.bfloat16)
    tgt3 = jax.random.randint(ks[5], (B, D, H, W), 0, 5, dtype=jnp.int32)
    task3 = [6]
    out3 = jax.block_until_ready(tal5_loss(pred3, tgt3, task3, tile_rows=16))
    ref3 = _reference(pred3, tgt3, task3)
    assert jnp.allclose(out3, ref3, atol=2e-3, rtol=2e-3), (out3, ref3)

    print("KERNEL_OK")
</pallas_src>

<mosaic_0001>
module attributes {stable_mosaic.version = 11 : i64} {
  func.func @_tal5_kernel(%arg0: i32, %arg1: i32, %arg2: i32, %arg3: memref<2xi32, #tpu.memory_space<smem>>, %arg4: memref<1x5x8x128xf32, #tpu.memory_space<vmem>>, %arg5: memref<1x8x128xi32, #tpu.memory_space<vmem>>, %arg6: memref<1x1x8x128xf32, #tpu.memory_space<vmem>>) attributes {dimension_semantics = [#tpu.dimension_semantics<parallel>, #tpu.dimension_semantics<parallel>, #tpu.dimension_semantics<arbitrary>], iteration_bounds = array<i64: 1, 2, 1>, scalar_prefetch = 1 : i64, scratch_operands = 0 : i64, tpu.core_type = #tpu.core_type<tc>, window_params = [{transform_indices = @transform_0, window_bounds = array<i64: 1, 5, 8, 128>}, {transform_indices = @transform_1, window_bounds = array<i64: 1, 8, 128>}, {transform_indices = @transform_2, window_bounds = array<i64: 1, 1, 8, 128>}]} {
    %c0_i32 = arith.constant 0 : i32
    %0 = arith.cmpi eq, %arg2, %c0_i32 : i32
    %1 = arith.extui %0 : i1 to i32
    %c0_i32_0 = arith.constant 0 : i32
    %2 = arith.cmpi ne, %1, %c0_i32_0 : i32
    scf.if %2 {
      %cst_42 = arith.constant 0.000000e+00 : f32
      %62 = vector.broadcast %cst_42 : f32 to vector<1x1x8x128xf32>
      %c0_43 = arith.constant 0 : index
      %c0_44 = arith.constant 0 : index
      %c0_45 = arith.constant 0 : index
      %c0_46 = arith.constant 0 : index
      %63 = vector.load %arg6[%c0_43, %c0_44, %c0_45, %c0_46] : memref<1x1x8x128xf32, #tpu.memory_space<vmem>>, vector<1x1x8x128xf32>
      tpu.vector_store %arg6[%c0_43, %c0_44, %c0_45, %c0_46], %62 {strides = array<i32>} : memref<1x1x8x128xf32, #tpu.memory_space<vmem>>, vector<1x1x8x128xf32>,
    } else {
    }
    %3 = arith.index_cast %arg1 : i32 to index
    %4 = memref.load %arg3[%3] : memref<2xi32, #tpu.memory_space<smem>>
    %c0 = arith.constant 0 : index
    %c0_1 = arith.constant 0 : index
    %c0_2 = arith.constant 0 : index
    %c0_3 = arith.constant 0 : index
    %5 = vector.load %arg4[%c0, %c0_1, %c0_2, %c0_3] : memref<1x5x8x128xf32, #tpu.memory_space<vmem>>, vector<1x1x8x128xf32>
    %6 = vector.shape_cast %5 : vector<1x1x8x128xf32> to vector<8x128xf32>
    %c0_i32_4 = arith.constant 0 : i32
    %7 = arith.cmpi eq, %4, %c0_i32_4 : i32
    %cst = arith.constant 1.000000e+00 : f32
    %cst_5 = arith.constant -1.000000e+00 : f32
    %8 = arith.select %7, %cst, %cst_5 : f32
    %9 = vector.broadcast %8 : f32 to vector<8x128xf32>
    %10 = arith.mulf %6, %9 : vector<8x128xf32>
    %c0_6 = arith.constant 0 : index
    %c1 = arith.constant 1 : index
    %c0_7 = arith.constant 0 : index
    %c0_8 = arith.constant 0 : index
    %11 = vector.load %arg4[%c0_6, %c1, %c0_7, %c0_8] : memref<1x5x8x128xf32, #tpu.memory_space<vmem>>, vector<1x1x8x128xf32>
    %12 = vector.shape_cast %11 : vector<1x1x8x128xf32> to vector<8x128xf32>
    %c1_i32 = arith.constant 1 : i32
    %13 = arith.cmpi eq, %4, %c1_i32 : i32
    %cst_9 = arith.constant 1.000000e+00 : f32
    %cst_10 = arith.constant -1.000000e+00 : f32
    %14 = arith.select %13, %cst_9, %cst_10 : f32
    %15 = vector.broadcast %14 : f32 to vector<8x128xf32>
    %16 = arith.mulf %12, %15 : vector<8x128xf32>
    %17 = arith.addf %10, %16 : vector<8x128xf32>
    %c0_11 = arith.constant 0 : index
    %c2 = arith.constant 2 : index
    %c0_12 = arith.constant 0 : index
    %c0_13 = arith.constant 0 : index
    %18 = vector.load %arg4[%c0_11, %c2, %c0_12, %c0_13] : memref<1x5x8x128xf32, #tpu.memory_space<vmem>>, vector<1x1x8x128xf32>
    %19 = vector.shape_cast %18 : vector<1x1x8x128xf32> to vector<8x128xf32>
    %c2_i32 = arith.constant 2 : i32
    %20 = arith.cmpi eq, %4, %c2_i32 : i32
    %cst_14 = arith.constant 1.000000e+00 : f32
    %cst_15 = arith.constant -1.000000e+00 : f32
    %21 = arith.select %20, %cst_14, %cst_15 : f32
    %22 = vector.broadcast %21 : f32 to vector<8x128xf32>
    %23 = arith.mulf %19, %22 : vector<8x128xf32>
    %24 = arith.addf %17, %23 : vector<8x128xf32>
    %c0_16 = arith.constant 0 : index
    %c3 = arith.constant 3 : index
    %c0_17 = arith.constant 0 : index
    %c0_18 = arith.constant 0 : index
    %25 = vector.load %arg4[%c0_16, %c3, %c0_17, %c0_18] : memref<1x5x8x128xf32, #tpu.memory_space<vmem>>, vector<1x1x8x128xf32>
    %26 = vector.shape_cast %25 : vector<1x1x8x128xf32> to vector<8x128xf32>
    %c3_i32 = arith.constant 3 : i32
    %27 = arith.cmpi eq, %4, %c3_i32 : i32
    %cst_19 = arith.constant 1.000000e+00 : f32
    %cst_20 = arith.constant -1.000000e+00 : f32
    %28 = arith.select %27, %cst_19, %cst_20 : f32
    %29 = vector.broadcast %28 : f32 to vector<8x128xf32>
    %30 = arith.mulf %26, %29 : vector<8x128xf32>
    %31 = arith.addf %24, %30 : vector<8x128xf32>
    %c0_21 = arith.constant 0 : index
    %c4 = arith.constant 4 : index
    %c0_22 = arith.constant 0 : index
    %c0_23 = arith.constant 0 : index
    %32 = vector.load %arg4[%c0_21, %c4, %c0_22, %c0_23] : memref<1x5x8x128xf32, #tpu.memory_space<vmem>>, vector<1x1x8x128xf32>
    %33 = vector.shape_cast %32 : vector<1x1x8x128xf32> to vector<8x128xf32>
    %c4_i32 = arith.constant 4 : i32
    %34 = arith.cmpi eq, %4, %c4_i32 : i32
    %cst_24 = arith.constant 1.000000e+00 : f32
    %cst_25 = arith.constant -1.000000e+00 : f32
    %35 = arith.select %34, %cst_24, %cst_25 : f32
    %36 = vector.broadcast %35 : f32 to vector<8x128xf32>
    %37 = arith.mulf %33, %36 : vector<8x128xf32>
    %38 = arith.addf %31, %37 : vector<8x128xf32>
    %c0_26 = arith.constant 0 : index
    %c0_27 = arith.constant 0 : index
    %c0_28 = arith.constant 0 : index
    %39 = vector.load %arg5[%c0_26, %c0_27, %c0_28] : memref<1x8x128xi32, #tpu.memory_space<vmem>>, vector<1x8x128xi32>
    %40 = vector.shape_cast %39 : vector<1x8x128xi32> to vector<8x128xi32>
    %c0_i32_29 = arith.constant 0 : i32
    %41 = vector.broadcast %c0_i32_29 : i32 to vector<8x128xi32>
    %42 = arith.cmpi sgt, %40, %41 : vector<8x128xi32>
    %cst_30 = arith.constant 0.000000e+00 : f32
    %43 = vector.broadcast %cst_30 : f32 to vector<8x128xf32>
    %44 = arith.maximumf %38, %43 : vector<8x128xf32>
    %cst_31 = arith.constant 0.000000e+00 : f32
    %45 = vector.broadcast %cst_31 : f32 to vector<8x128xf32>
    %46 = arith.select %42, %38, %45 : vector<8x128xi1>, vector<8x128xf32>
    %47 = arith.subf %44, %46 : vector<8x128xf32>
    %48 = math.absf %38 : vector<8x128xf32>
    %cst_32 = arith.constant 0.000000e+00 : f32
    %49 = vector.broadcast %cst_32 : f32 to vector<8x128xf32>
    %50 = arith.subf %49, %48 : vector<8x128xf32>
    %51 = math.exp %50 : vector<8x128xf32>
    %52 = math.log1p %51 : vector<8x128xf32>
    %53 = arith.addf %47, %52 : vector<8x128xf32>
    %c0_33 = arith.constant 0 : index
    %c0_34 = arith.constant 0 : index
    %c0_35 = arith.constant 0 : index
    %c0_36 = arith.constant 0 : index
    %54 = vector.load %arg6[%c0_33, %c0_34, %c0_35, %c0_36] : memref<1x1x8x128xf32, #tpu.memory_space<vmem>>, vector<1x1x8x128xf32>
    %55 = vector.shape_cast %54 : vector<1x1x8x128xf32> to vector<8x128xf32>
    %56 = vector.shape_cast %53 : vector<8x128xf32> to vector<1x8x128xf32>
    %cst_37 = arith.constant dense<0.000000e+00> : vector<8x128xf32>
    %57 = vector.multi_reduction <add>, %56, %cst_37 [0] : vector<1x8x128xf32> to vector<8x128xf32>
    %58 = arith.addf %55, %57 : vector<8x128xf32>
    %c0_38 = arith.constant 0 : index
    %c0_39 = arith.constant 0 : index
    %c0_40 = arith.constant 0 : index
    %c0_41 = arith.constant 0 : index
    %59 = vector.load %arg6[%c0_38, %c0_39, %c0_40, %c0_41] : memref<1x1x8x128xf32, #tpu.memory_space<vmem>>, vector<1x1x8x128xf32>
    %60 = vector.shape_cast %59 : vector<1x1x8x128xf32> to vector<8x128xf32>
    %61 = vector.shape_cast %58 : vector<8x128xf32> to vector<1x1x8x128xf32>
    tpu.vector_store %arg6[%c0_38, %c0_39, %c0_40, %c0_41], %61 {strides = array<i32>} : memref<1x1x8x128xf32, #tpu.memory_space<vmem>>, vector<1x1x8x128xf32>,
    return
  }
  func.func @transform_0(%arg0: i32, %arg1: i32, %arg2: i32, %arg3: memref<2xi32, #tpu.memory_space<smem>>) -> (i32, i32, i32, i32) {
    %c1_i32 = arith.constant 1 : i32
    %0 = arith.muli %arg0, %c1_i32 : i32
    %1 = arith.addi %0, %arg2 : i32
    %c0_i32 = arith.constant 0 : i32
    %c0_i32_0 = arith.constant 0 : i32
    %c0_i32_1 = arith.constant 0 : i32
    return %arg1, %c0_i32, %1, %c0_i32_0 : i32, i32, i32, i32
  }
  func.func @transform_1(%arg0: i32, %arg1: i32, %arg2: i32, %arg3: memref<2xi32, #tpu.memory_space<smem>>) -> (i32, i32, i32) {
    %c1_i32 = arith.constant 1 : i32
    %0 = arith.muli %arg0, %c1_i32 : i32
    %1 = arith.addi %0, %arg2 : i32
    %c0_i32 = arith.constant 0 : i32
    %c0_i32_0 = arith.constant 0 : i32
    return %arg1, %1, %c0_i32 : i32, i32, i32
  }
  func.func @transform_2(%arg0: i32, %arg1: i32, %arg2: i32, %arg3: memref<2xi32, #tpu.memory_space<smem>>) -> (i32, i32, i32, i32) {
    %c0_i32 = arith.constant 0 : i32
    %c0_i32_0 = arith.constant 0 : i32
    %c0_i32_1 = arith.constant 0 : i32
    return %arg0, %arg1, %c0_i32, %c0_i32_0 : i32, i32, i32, i32
  }
}

</mosaic_0001>

<llo_original>
// kernel: _tal5_forward.1
$region0: #{_tal5_forward.1}
  #allocation0 [shape = 'u32[]', space=smem, size = 0x4, offset = 0x4, fixed_abs, tag = 'smem constant byte address 0x4 - core index']
  #allocation1 [shape = 'u32[72,128]{1,0:T(1,128)}', space=vmem, size = 0x9000, scoped, tag = 'internal scratch']
  #allocation2 [shape = 's32[1]{0}', space=sflag, size = 0x4, scoped, tag = 'scoped memory for _tal5_forward.1']
  #allocation3 [shape = 'u8[512]{0}', space=smem, size = 0x200, scoped, tag = 'prefetched SMEM operand 0']
  %s0 = inlined_call_operand.vmem [shape: s32[2], index: 0, kind: input, shape index: {}]
  %s1 = inlined_call_operand.vmem [shape: f32[2,5,8,128], index: 1, kind: input, shape index: {}]
  %s2 = inlined_call_operand.vmem [shape: s32[2,8,128], index: 2, kind: input, shape index: {}]
  %s3 = inlined_call_operand.vmem [shape: f32[1,2,8,128], index: 3, kind: output, shape index: {}]
  %s4 = sld [smem:[#allocation0]]
  $region45: #{_tal5_forward.1} parent=0
    _
  %s6 = ssub.s32 1, %s4
  %s7 = scalar_select 0, %s6, %s4
  %s9 = sshll.u32 %s0, 4
  %s10 = int_to_ptr.vmem [resolvable:$true] %s9
  %12 = dma.vmem_to_smem %s10, 16, [#allocation3], [#allocation2]
  %14 = dma.done [#allocation2], 16
  %15 = sfence
  loop: start=0, step=1, limit=4
  $region2: #{_tal5_forward.1} parent=0 // loop_pre_header
    _
  $region3: #{_tal5_forward.1} parent=0 // loop_header
    %s17 = sphi 0, %s21
    %p18 = scmp.ge.s32.totalorder %s17, 4
    %s24 = sphi 0, %s43
    %s25 = sphi 0, %s39
    %s26 = sphi 0, %s35
    %s27 = sphi 0, %s24
    %s28 = sphi 0, %s25
    %s29 = sphi 0, %s26
    %s30 = sphi 0, %s27
    %s31 = sphi 0, %s28
    %s32 = sphi 0, %s29
    %s50 = sphi 0, %s52
    %s53 = sphi 0, %s50
    %s54 = sphi 0, %s53
    %s70 = sphi 0, %s54
    %s80 = sphi 0, %s82
    %s83 = sphi 0, %s80
    %s84 = sphi 0, %s83
    %s100 = sphi 0, %s84
    %s108 = sphi 0, %s110
    %s111 = sphi 0, %s108
    %s112 = sphi 0, %s111
    %s128 = sphi 0, %s112
  $region4: #{_tal5_forward.1} parent=0 // loop_header_branch
    %20 = sbr.rel (%p18) target = $region8
  $region5: #{_tal5_forward.1} parent=0 // loop_body
    %s22 = ssub.s32 %s17, 1
    %s23 = ssub.s32 %s17, 2
    %s33 = sadd.s32 1, %s26
    %p34 = scmp.ge.s32.totalorder %s33, 1
    %s35 = scalar_select %p34, 0, %s33
    %s36 = sadd.s32 1, %s25
    %s37 = scalar_select %p34, %s36, %s25
    %p38 = scmp.ge.s32.totalorder %s37, 2
    %s39 = scalar_select %p38, 0, %s37
    %s40 = sadd.s32 1, %s24
    %s41 = scalar_select %p38, %s40, %s24
    %p42 = scmp.ge.s32.totalorder %s41, 1
    %s43 = scalar_select %p42, 0, %s41
    %s44 = sadd.s32 %s24, %s26
    %s45 = sadd.s32 %s43, %s35
    %s46 = ssub.s32 %s25, %s39
    %s47 = ssub.s32 %s44, %s45
    %s48 = sor.u32 %s46, %s47
    %p49 = scmp.eq.s32.totalorder %s48, 0
    %s51 = sadd.s32 %s50, 1
    %s52 = scalar_select %p49, %s50, %s51
    %p55 = pneg %p49
    %p56 = scmp.eq.s32.totalorder %s17, 1
    %p57 = por %p55, %p56
    %p58 = scmp.ne.s32.totalorder %s50, %s53
    %p59 = scmp.eq.s32.totalorder %s17, 0
    %p60 = por %p58, %p59
    %p61 = scmp.ne.s32.totalorder %s50, %s53
    %p62 = scmp.eq.s32.totalorder %s22, 1
    %p63 = por %p61, %p62
    %p64 = scmp.ne.s32.totalorder %s53, %s54
    %p65 = scmp.eq.s32.totalorder %s22, 0
    %p66 = por %p64, %p65
    %p67 = scmp.ne.s32.totalorder %s53, %s54
    %p68 = scmp.eq.s32.totalorder %s23, 1
    %p69 = por %p67, %p68
    %p71 = scmp.ne.s32.totalorder %s54, %s70
    %p72 = scmp.eq.s32.totalorder %s23, 0
    %p73 = por %p71, %p72
    %s74 = sadd.s32 %s24, %s26
    %s75 = sadd.s32 %s43, %s35
    %s76 = ssub.s32 %s25, %s39
    %s77 = ssub.s32 %s74, %s75
    %s78 = sor.u32 %s76, %s77
    %p79 = scmp.eq.s32.totalorder %s78, 0
    %s81 = sadd.s32 %s80, 1
    %s82 = scalar_select %p79, %s80, %s81
    %p85 = pneg %p79
    %p86 = scmp.eq.s32.totalorder %s17, 1
    %p87 = por %p85, %p86
    %p88 = scmp.ne.s32.totalorder %s80, %s83
    %p89 = scmp.eq.s32.totalorder %s17, 0
    %p90 = por %p88, %p89
    %p91 = scmp.ne.s32.totalorder %s80, %s83
    %p92 = scmp.eq.s32.totalorder %s22, 1
    %p93 = por %p91, %p92
    %p94 = scmp.ne.s32.totalorder %s83, %s84
    %p95 = scmp.eq.s32.totalorder %s22, 0
    %p96 = por %p94, %p95
    %p97 = scmp.ne.s32.totalorder %s83, %s84
    %p98 = scmp.eq.s32.totalorder %s23, 1
    %p99 = por %p97, %p98
    %p101 = scmp.ne.s32.totalorder %s84, %s100
    %p102 = scmp.eq.s32.totalorder %s23, 0
    %p103 = por %p101, %p102
    %s104 = ssub.s32 %s24, %s43
    %s105 = ssub.s32 %s25, %s39
    %s106 = sor.u32 %s104, %s105
    %p107 = scmp.eq.s32.totalorder %s106, 0
    %s109 = sadd.s32 %s108, 1
    %s110 = scalar_select %p107, %s108, %s109
    %p113 = pneg %p107
    %p114 = scmp.eq.s32.totalorder %s17, 1
    %p115 = por %p113, %p114
    %p116 = scmp.ne.s32.totalorder %s108, %s111
    %p117 = scmp.eq.s32.totalorder %s17, 0
    %p118 = por %p116, %p117
    %p119 = scmp.ne.s32.totalorder %s108, %s111
    %p120 = scmp.eq.s32.totalorder %s22, 1
    %p121 = por %p119, %p120
    %p122 = scmp.ne.s32.totalorder %s111, %s112
    %p123 = scmp.eq.s32.totalorder %s22, 0
    %p124 = por %p122, %p123
    %p125 = scmp.ne.s32.totalorder %s111, %s112
    %p126 = scmp.eq.s32.totalorder %s23, 1
    %p127 = por %p125, %p126
    %p129 = scmp.ne.s32.totalorder %s112, %s128
    %p130 = scmp.eq.s32.totalorder %s23, 0
    %p131 = por %p129, %p130
    %p132 = scmp.le.s32.totalorder 1, %s17
    %p133 = scmp.lt.s32.totalorder %s17, 3
    %p134 = pnand %p132, %p133
    %p135 = pneg %p134
    // Predicated region
    $region9: #{_tal5_forward.1} parent=5 // pred_check
      _
    $region10: #{_tal5_forward.1} parent=5 // pred_check_branch
      %137 = sbr.rel (%p134) target = $region12
    $region11: #{_tal5_forward.1} parent=5 // pred_region
      %s138 = ssub.s32 %s17, 1
    $region12: #{_tal5_forward.1} parent=5 // pred_fallthru
      _
    %p139 = scmp.lt.s32.totalorder %s17, 2
    // Predicated region
    $region13: #{_tal5_forward.1} parent=5 // pred_check
      %p140 = pneg %p139
    $region14: #{_tal5_forward.1} parent=5 // pred_check_branch
      %142 = sbr.rel (%p140) target = $region16
    $region15: #{_tal5_forward.1} parent=5 // pred_region
      // Predicated region
      $region17: #{_tal5_forward.1} parent=15 // pred_check
        %p143 = pneg %p60
      $region18: #{_tal5_forward.1} parent=15 // pred_check_branch
        %145 = sbr.rel (%p143) target = $region20
      $region19: #{_tal5_forward.1} parent=15 // pred_region
        %s146 = sadd.s32 %s24, %s26
        %p147 = scmp.lt.s32.totalorder %s25, 1
        %s148 = scalar_select %p147, %s25, 1
        %p149 = scmp.lt.s32.totalorder %s146, 0
        %s150 = scalar_select %p149, %s146, 0
        %s151 = smul.addr %s148, 5
        %s152 = sadd.s32 %s150, %s151
        %s153 = smul.addr %s152, 8
        %s154 = scalar_lea.vmem %s1, %s153
        %s155 = sadd.s32 %s24, %s26
      $region20: #{_tal5_forward.1} parent=15 // pred_fallthru
        _
      // Predicated region
      $region21: #{_tal5_forward.1} parent=15 // pred_check
        %p156 = pneg %p90
      $region22: #{_tal5_forward.1} parent=15 // pred_check_branch
        %158 = sbr.rel (%p156) target = $region24
      $region23: #{_tal5_forward.1} parent=15 // pred_region
        %s159 = sadd.s32 %s24, %s26
        %p160 = scmp.lt.s32.totalorder %s25, 1
        %s161 = scalar_select %p160, %s25, 1
        %p162 = scmp.lt.s32.totalorder %s159, 0
        %s163 = scalar_select %p162, %s159, 0
        %s164 = sadd.s32 %s163, %s161
        %s165 = smul.addr %s164, 8
        %s166 = scalar_lea.vmem %s2, %s165
        %s167 = sadd.s32 %s24, %s26
      $region24: #{_tal5_forward.1} parent=15 // pred_fallthru
        _
    $region16: #{_tal5_forward.1} parent=5 // pred_fallthru
      _
    %p168 = scmp.le.s32.totalorder 1, %s17
    %p169 = scmp.lt.s32.totalorder %s17, 3
    %p170 = pnand %p168, %p169
    %p171 = pneg %p170
    // Predicated region
    $region25: #{_tal5_forward.1} parent=5 // pred_check
      _
    $region26: #{_tal5_forward.1} parent=5 // pred_check_branch
      %173 = sbr.rel (%p170) target = $region28
    $region27: #{_tal5_forward.1} parent=5 // pred_region
      %s174 = ssub.s32 %s17, 1
      %s175 = sadd.s32 %s27, %s29
      %p176 = scmp.lt.s32.totalorder %s28, 1
      %s177 = scalar_select %p176, %s28, 1
      %p178 = scmp.lt.s32.totalorder %s175, 0
      %s179 = scalar_select %p178, %s175, 0
      %s180 = smul.addr %s177, 5
      %s181 = sadd.s32 %s179, %s180
      %s182 = smul.addr %s181, 8
      %s183 = scalar_lea.vmem %s1, %s182
      %p184 = pneg %p66
      %p185 = pneg %p63
      %s186 = sadd.s32 %s27, %s29
      %p187 = scmp.lt.s32.totalorder %s28, 1
      %s188 = scalar_select %p187, %s28, 1
      %p189 = scmp.lt.s32.totalorder %s186, 0
      %s190 = scalar_select %p189, %s186, 0
      %s191 = sadd.s32 %s190, %s188
      %s192 = smul.addr %s191, 8
      %s193 = scalar_lea.vmem %s2, %s192
      %p194 = pneg %p96
      %p195 = pneg %p93
      %p196 = pneg %p124
      %p197 = pneg %p121
      %p198 = scmp.lt.s32.totalorder %s27, 0
      %s199 = scalar_select %p198, %s27, 0
      %p200 = scmp.lt.s32.totalorder %s28, 1
      %s201 = scalar_select %p200, %s28, 1
      %s202 = smul.addr %s199, 2
      %s203 = sadd.s32 %s201, %s202
      %s204 = smul.addr %s203, 8
      %s205 = scalar_lea.vmem %s3, %s204
      %s206 = sadd.s32 %s27, %s29
      %p207 = scmp.lt.s32.totalorder %s28, 1
      %s208 = scalar_select %p207, %s28, 1
      %p209 = scmp.lt.s32.totalorder %s206, 0
      %s210 = scalar_select %p209, %s206, 0
      %s211 = smul.addr %s208, 5
      %s212 = sadd.s32 %s210, %s211
      %s213 = smul.addr %s212, 8
      %s214 = scalar_lea.vmem %s1, %s213
      %s215 = sadd.s32 %s27, %s29
      %s216 = sadd.s32 %s27, %s29
      %p217 = scmp.lt.s32.totalorder %s28, 1
      %s218 = scalar_select %p217, %s28, 1
      %p219 = scmp.lt.s32.totalorder %s216, 0
      %s220 = scalar_select %p219, %s216, 0
      %s221 = sadd.s32 %s220, %s218
      %s222 = smul.addr %s221, 8
      %s223 = scalar_lea.vmem %s2, %s222
      %s224 = sadd.s32 %s27, %s29
      %p225 = scmp.lt.s32.totalorder %s27, 0
      %s226 = scalar_select %p225, %s27, 0
      %p227 = scmp.lt.s32.totalorder %s28, 1
      %s228 = scalar_select %p227, %s28, 1
      %s229 = smul.addr %s226, 2
      %s230 = sadd.s32 %s228, %s229
      %s231 = smul.addr %s230, 8
      %s232 = scalar_lea.vmem %s3, %s231
      %p233 = scmp.eq.s32.totalorder %s29, 0
      // Predicated region
      $region29: #{_tal5_forward.1} parent=27 // pred_check
        %p234 = pneg %p233
      $region30: #{_tal5_forward.1} parent=27 // pred_check_branch
        %236 = sbr.rel (%p234) target = $region32
      $region31: #{_tal5_forward.1} parent=27 // pred_region
        %237 = vst [vmem:[%s232] sm:$0xff] 0.0
      $region32: #{_tal5_forward.1} parent=27 // pred_fallthru
        _
      %s238 = sld [smem:[#allocation3 + %s28]]
      %v239 = vld [vmem:[%s214] sm:$0xff]
      %p240 = scmp.eq.s32.totalorder %s238, 0
      %s241 = scalar_select %p240, 1.0, -1.0
      %v242 = vstv %s241
      %v243 = vmul.f32 %v239, %v242
      %s244 = scalar_lea.vmem %s214, 8
      %v245 = vld [vmem:[%s244] sm:$0xff]
      %p246 = scmp.eq.s32.totalorder %s238, 1
      %s247 = scalar_select %p246, 1.0, -1.0
      %v248 = vstv %s247
      %v249 = vmul.f32 %v245, %v248
      %v250 = vadd.f32 %v243, %v249
      %s251 = scalar_lea.vmem %s214, 16
      %v252 = vld [vmem:[%s251] sm:$0xff]
      %p253 = scmp.eq.s32.totalorder %s238, 2
      %s254 = scalar_select %p253, 1.0, -1.0
      %v255 = vstv %s254
      %v256 = vmul.f32 %v252, %v255
      %v257 = vadd.f32 %v250, %v256
      %s258 = scalar_lea.vmem %s214, 24
      %v259 = vld [vmem:[%s258] sm:$0xff]
      %p260 = scmp.eq.s32.totalorder %s238, 3
      %s261 = scalar_select %p260, 1.0, -1.0
      %v262 = vstv %s261
      %v263 = vmul.f32 %v259, %v262
      %v264 = vadd.f32 %v257, %v263
      %s265 = scalar_lea.vmem %s214, 32
      %v266 = vld [vmem:[%s265] sm:$0xff]
      %p267 = scmp.eq.s32.totalorder %s238, 4
      %s268 = scalar_select %p267, 1.0, -1.0
      %v269 = vstv %s268
      %v270 = vmul.f32 %v266, %v269
      %v271 = vadd.f32 %v264, %v270
      %v272 = vld [vmem:[%s223] sm:$0xff]
      %vm273 = vcmp.gt.s32.totalorder %v272, 0
      %v274 = vmax.f32 %v271, 0.0
      %v275 = vsel %vm273, %v271, 0.0
      %v276 = vsub.f32 %v274, %v275
      %v277 = vand.u32 2147483647, %v271
      %v278 = vsub.f32 0.0, %v277
      %v279 = vmul.f32 %v278, 1.442695
      %v280 = vpow.pop %v279
      %v281 = vadd.f32 %v280, 1.0
      %v282 = vlog2.pop %v281
      %v283 = vmul.f32 %v282, 0.6931472
      %v284 = vmul.f32 -0.5, %v280
      %v285 = vadd.f32 %v284, 1.0
      %v286 = vmul.f32 %v285, %v280
      %v287 = vand.u32 2147483647, %v280
      %vm288 = vcmp.lt.f32.partialorder %v287, 0.0004427343
      %v289 = vsel %vm288, %v286, %v283
      %v290 = vadd.f32 %v276, %v289
      %v291 = vld [vmem:[%s232] sm:$0xff]
      %v292 = vadd.f32 %v290, 0.0
      %v293 = vadd.f32 %v291, %v292
      %294 = vst [vmem:[%s232] sm:$0xff] %v293
      %p295 = scmp.lt.s32.totalorder %s27, 0
      %s296 = scalar_select %p295, %s27, 0
      %p297 = scmp.lt.s32.totalorder %s28, 1
      %s298 = scalar_select %p297, %s28, 1
      %s299 = smul.addr %s296, 2
      %s300 = sadd.s32 %s298, %s299
      %s301 = smul.addr %s300, 8
      %s302 = scalar_lea.vmem %s3, %s301
      // Predicated region
      $region33: #{_tal5_forward.1} parent=27 // pred_check
        %p303 = pneg %p121
      $region34: #{_tal5_forward.1} parent=27 // pred_check_branch
        %305 = sbr.rel (%p303) target = $region36
      $region35: #{_tal5_forward.1} parent=27 // pred_region
        _
      $region36: #{_tal5_forward.1} parent=27 // pred_fallthru
        _
    $region28: #{_tal5_forward.1} parent=5 // pred_fallthru
      _
    %p306 = scmp.le.s32.totalorder 2, %s17
    // Predicated region
    $region37: #{_tal5_forward.1} parent=5 // pred_check
      %p307 = pneg %p306
    $region38: #{_tal5_forward.1} parent=5 // pred_check_branch
      %309 = sbr.rel (%p307) target = $region40
    $region39: #{_tal5_forward.1} parent=5 // pred_region
      %s310 = ssub.s32 %s17, 2
      // Predicated region
      $region41: #{_tal5_forward.1} parent=39 // pred_check
        %p311 = pneg %p127
      $region42: #{_tal5_forward.1} parent=39 // pred_check_branch
        %313 = sbr.rel (%p311) target = $region44
      $region43: #{_tal5_forward.1} parent=39 // pred_region
        %p314 = scmp.lt.s32.totalorder %s30, 0
        %s315 = scalar_select %p314, %s30, 0
        %p316 = scmp.lt.s32.totalorder %s31, 1
        %s317 = scalar_select %p316, %s31, 1
        %s318 = smul.addr %s315, 2
        %s319 = sadd.s32 %s317, %s318
        %s320 = smul.addr %s319, 8
        %s321 = scalar_lea.vmem %s3, %s320
      $region44: #{_tal5_forward.1} parent=39 // pred_fallthru
        _
    $region40: #{_tal5_forward.1} parent=5 // pred_fallthru
      _
  $region6: #{_tal5_forward.1} parent=0 // loop_footer
    %s21 = sadd.s32 1, %s17
  $region7: #{_tal5_forward.1} parent=0 // loop_footer_branch
    %16 = sbr.rel target = $region3
  $region8: #{_tal5_forward.1} parent=0 // loop_exit
    _

</llo_original>
